<compile_context>
chip_gen: v7x
topology: tpu7x:2x2x1
jax: 0.10.0
libtpu: 0.0.40
codegen_flags: <defaults>
</compile_context>

<pallas_src>
import jax
import jax.numpy as jnp
from jax import lax
from jax.experimental import pallas as pl
from jax.experimental.pallas import tpu as pltpu


def _basic_block_kernel(x_ref, b1_ref, b2_ref, bias_ref, out_ref):
    """One grid step = one batch element, whole image, lane-dense layout.

    x_ref   : (1, H, W*C)   bf16  unpadded input, channels folded into lanes
    b1_ref  : (3*W*C, W*C)  bf16  conv1 weights (+ bn1 scale) as banded matrix
    b2_ref  : (3*W*C, W*C)  bf16  conv2 weights (+ bn2 scale) as banded matrix
    bias_ref: (2, W*C)      f32   [bn1 bias ; bn2 bias], tiled per lane
    out_ref : (1, H, W*C)   f32
    """
    H = x_ref.shape[1]
    wc_in = x_ref.shape[2]
    wc_out = out_ref.shape[2]

    x = x_ref[0]                                          # (H, W*C) bf16
    # 1-row halo (the conv's H-direction zero padding); W-direction padding is
    # already folded into the banded weight matrices.
    zr_in = jnp.zeros((1, wc_in), x.dtype)
    xr = jnp.concatenate([zr_in, x, zr_in], axis=0)       # (H+2, W*C)
    # im2col over kh only: (H, 3*W*C); kw and ci live inside the banded matrix.
    x3 = jnp.concatenate([xr[0:H], xr[1:H + 1], xr[2:H + 2]], axis=1)

    # ---- conv1 (+ folded bn1 scale): single MXU matmul, K = 3*W*C ----------
    y = jnp.dot(x3, b1_ref[...], preferred_element_type=jnp.float32)
    y = jnp.maximum(y + bias_ref[0:1, :], 0.0)            # bn1 bias + ReLU (f32)

    # ---- conv2 (+ folded bn2 scale) -----------------------------------------
    yb = y.astype(jnp.bfloat16)
    zr_out = jnp.zeros((1, wc_out), jnp.bfloat16)
    yr = jnp.concatenate([zr_out, yb, zr_out], axis=0)
    y3 = jnp.concatenate([yr[0:H], yr[1:H + 1], yr[2:H + 2]], axis=1)
    z = jnp.dot(y3, b2_ref[...], preferred_element_type=jnp.float32)

    # ---- bn2 bias + residual + ReLU (all f32 element-wise) ------------------
    z = z + bias_ref[1:2, :] + x.astype(jnp.float32)
    out_ref[0] = jnp.maximum(z, 0.0).astype(out_ref.dtype)


def _fold_bn(gamma, beta, running_mean, running_var, eps=1e-5):
    scale = gamma / jnp.sqrt(running_var + eps)
    bias = beta - running_mean * scale
    return scale.astype(jnp.float32), bias.astype(jnp.float32)


def _banded_conv_matrix(w_oihw, width, scale):
    """Bake a 3x3 / stride-1 / pad-1 conv (+ per-output-channel scale) into a
    banded matrix B of shape (3*width*Cin, width*Cout) so that, with the 1-row
    zero-padded activation Xr laid out as (H+2, width*Cin),

        out[h, w*Cout + co] = concat(Xr[h], Xr[h+1], Xr[h+2]) @ B

    equals scale[co] * conv3x3(x, w, padding=1)[h, w, co].  The W-direction
    zero padding of the conv is represented by the zero structure of B."""
    c_out, c_in, kh, kw = w_oihw.shape
    assert (kh, kw) == (3, 3)
    w_k = jnp.transpose(w_oihw, (2, 3, 1, 0)).astype(jnp.float32)   # (kh,kw,ci,co)
    # shift[kw, wpad, w] = 1  iff  wpad == w + kw   (wpad in padded-width space)
    shift = jnp.stack([jnp.eye(width + 2, width, k=-k, dtype=jnp.float32)
                       for k in range(3)])                           # (3, W+2, W)
    # b[kh, wpad, ci, w, co] = sum_kw shift[kw, wpad, w] * w_k[kh, kw, ci, co]
    b = jnp.einsum('spw,hsio->hpiwo', shift, w_k)
    b = b[:, 1:width + 1]                      # drop lane-pad rows -> (3,W,Cin,W,Cout)
    b = b * scale[None, None, None, None, :]   # fold BN scale into the conv
    return b.reshape(3 * width * c_in, width * c_out)


@jax.jit
def basic_block_forward(x_nchw, w1, bn1_params, w2, bn2_params):
    """BasicBlock forward (stride=1, downsample=None), eval-mode BatchNorm.

    x_nchw : (N, C, H, W) float32 (PyTorch layout)
    w1, w2 : (C, C, 3, 3) conv weights (PyTorch OIHW layout)
    bn*_params: (gamma, beta, running_mean, running_var)
    """
    N, c_in, H, W = x_nchw.shape
    c_out = w1.shape[0]
    if c_in != c_out or w2.shape[0] != c_out or w2.shape[1] != c_out:
        # TODO(synk): stride>1 / downsample branch of BasicBlock not implemented.
        raise ValueError("Kernel implements the stride=1, downsample=None "
                         "BasicBlock; requires Cin == Cout.")

    # NCHW -> lane-dense (N, H, W*C).  In a full NHWC network this transpose
    # disappears (keep activations in this layout end-to-end).
    x_lane = jnp.transpose(x_nchw, (0, 2, 3, 1)).reshape(N, H, W * c_in)
    x_lane = x_lane.astype(jnp.bfloat16)

    s1, b1 = _fold_bn(*bn1_params)
    s2, b2 = _fold_bn(*bn2_params)

    # Conv weights + BN scales baked into banded matrices (parameter
    # preprocessing; done offline / once for a real network).
    b1_mat = _banded_conv_matrix(w1, W, s1).astype(jnp.bfloat16)   # (3*W*C, W*C)
    b2_mat = _banded_conv_matrix(w2, W, s2).astype(jnp.bfloat16)
    bias = jnp.stack([jnp.tile(b1, W), jnp.tile(b2, W)])           # (2, W*C) f32

    wci, wco = W * c_in, W * c_out
    out_lane = pl.pallas_call(
        _basic_block_kernel,
        out_shape=jax.ShapeDtypeStruct((N, H, wco), jnp.float32),
        grid_spec=pltpu.PrefetchScalarGridSpec(
            num_scalar_prefetch=0,
            grid=(N,),
            in_specs=[
                pl.BlockSpec((1, H, wci), lambda n: (n, 0, 0)),
                pl.BlockSpec((3 * wci, wco), lambda n: (0, 0)),
                pl.BlockSpec((3 * wco, wco), lambda n: (0, 0)),
                pl.BlockSpec((2, wco), lambda n: (0, 0)),
            ],
            out_specs=pl.BlockSpec((1, H, wco), lambda n: (n, 0, 0)),
        ),
        compiler_params=pltpu.CompilerParams(
            dimension_semantics=("parallel",)),
    )(x_lane, b1_mat, b2_mat, bias)

    # lane-dense (N, H, W*C) -> NCHW for the PyTorch-facing API.
    return jnp.transpose(out_lane.reshape(N, H, W, c_out), (0, 3, 1, 2))


def _reference_forward(x_nchw, w1, bn1_params, w2, bn2_params):
    """Pure-JAX (lax.conv) reference with the same eval-mode BN semantics."""
    def conv3x3(x, w):
        return lax.conv_general_dilated(
            x, w, window_strides=(1, 1), padding=((1, 1), (1, 1)),
            dimension_numbers=("NCHW", "OIHW", "NCHW"))

    def bn(x, params, eps=1e-5):
        gamma, beta, mean, var = params
        sc = (gamma / jnp.sqrt(var + eps)).reshape(1, -1, 1, 1)
        bi = (beta - mean * gamma / jnp.sqrt(var + eps)).reshape(1, -1, 1, 1)
        return x * sc + bi

    out = jax.nn.relu(bn(conv3x3(x_nchw, w1), bn1_params))
    out = bn(conv3x3(out, w2), bn2_params)
    out = out + x_nchw
    return jax.nn.relu(out)


if __name__ == "__main__":
    key = jax.random.PRNGKey(0)
    N, C, H, W = 2, 4, 16, 16       # inplanes = planes = 4, stride = 1
    planes = C

    k = jax.random.split(key, 7)
    x = jax.random.normal(k[0], (N, C, H, W), dtype=jnp.float32)

    # Deterministic synthetic parameters (matching PyTorch layer shapes).
    w1 = jax.random.normal(k[1], (planes, C, 3, 3), dtype=jnp.float32) * 0.1
    w2 = jax.random.normal(k[2], (planes, planes, 3, 3), dtype=jnp.float32) * 0.1
    bn1 = (jax.random.normal(k[3], (planes,)) * 0.1 + 1.0,   # gamma
           jax.random.normal(k[4], (planes,)) * 0.1,          # beta
           jnp.zeros((planes,), jnp.float32),                 # running_mean
           jnp.ones((planes,), jnp.float32))                  # running_var
    bn2 = (jax.random.normal(k[5], (planes,)) * 0.1 + 1.0,
           jax.random.normal(k[6], (planes,)) * 0.1,
           jnp.zeros((planes,), jnp.float32),
           jnp.ones((planes,), jnp.float32))

    out = jax.block_until_ready(basic_block_forward(x, w1, bn1, w2, bn2))
    ref = jax.block_until_ready(_reference_forward(x, w1, bn1, w2, bn2))

    assert out.shape == (N, C, H, W)
    # bf16 MXU inputs with f32 accumulation: compare against the f32 reference
    # with a tolerance sized for bf16 input rounding (~2^-9 relative).
    assert jnp.max(jnp.abs(out - ref)) < 5e-2, "Pallas kernel mismatch vs reference"

    print("KERNEL_OK")
</pallas_src>

<mosaic_0001>
module attributes {stable_mosaic.version = 11 : i64} {
  func.func @_basic_block_kernel(%arg0: i32, %arg1: memref<1x16x64xbf16, #tpu.memory_space<vmem>>, %arg2: memref<192x64xbf16, #tpu.memory_space<vmem>>, %arg3: memref<192x64xbf16, #tpu.memory_space<vmem>>, %arg4: memref<2x64xf32, #tpu.memory_space<vmem>>, %arg5: memref<1x16x64xf32, #tpu.memory_space<vmem>>) attributes {dimension_semantics = [#tpu.dimension_semantics<parallel>], iteration_bounds = array<i64: 2>, scalar_prefetch = 0 : i64, scratch_operands = 0 : i64, tpu.core_type = #tpu.core_type<tc>, window_params = [{transform_indices = @transform_0, window_bounds = array<i64: 1, 16, 64>}, {pipeline_mode = #tpu.pipeline_mode<synchronous>, transform_indices = @transform_1, window_bounds = array<i64: 192, 64>}, {pipeline_mode = #tpu.pipeline_mode<synchronous>, transform_indices = @transform_2, window_bounds = array<i64: 192, 64>}, {pipeline_mode = #tpu.pipeline_mode<synchronous>, transform_indices = @transform_3, window_bounds = array<i64: 2, 64>}, {transform_indices = @transform_4, window_bounds = array<i64: 1, 16, 64>}]} {
    %c0 = arith.constant 0 : index
    %c0_0 = arith.constant 0 : index
    %c0_1 = arith.constant 0 : index
    %0 = vector.load %arg1[%c0, %c0_0, %c0_1] : memref<1x16x64xbf16, #tpu.memory_space<vmem>>, vector<1x16x64xbf16>
    %1 = vector.shape_cast %0 : vector<1x16x64xbf16> to vector<16x64xbf16>
    %cst = arith.constant 0.000000e+00 : bf16
    %2 = vector.broadcast %cst : bf16 to vector<1x64xbf16>
    %3 = tpu.concatenate %2, %1, %2 in 0 : vector<1x64xbf16>, vector<16x64xbf16>, vector<1x64xbf16> -> vector<18x64xbf16>
    %4 = vector.extract_strided_slice %3 {offsets = [0, 0], sizes = [16, 64], strides = [1, 1]} : vector<18x64xbf16> to vector<16x64xbf16>
    %5 = vector.extract_strided_slice %3 {offsets = [1, 0], sizes = [16, 64], strides = [1, 1]} : vector<18x64xbf16> to vector<16x64xbf16>
    %6 = vector.extract_strided_slice %3 {offsets = [2, 0], sizes = [16, 64], strides = [1, 1]} : vector<18x64xbf16> to vector<16x64xbf16>
    %7 = tpu.concatenate %4, %5, %6 in 1 : vector<16x64xbf16>, vector<16x64xbf16>, vector<16x64xbf16> -> vector<16x192xbf16>
    %c0_2 = arith.constant 0 : index
    %c0_3 = arith.constant 0 : index
    %8 = vector.load %arg2[%c0_2, %c0_3] : memref<192x64xbf16, #tpu.memory_space<vmem>>, vector<192x64xbf16>
    %cst_4 = arith.constant dense<0.000000e+00> : vector<16x64xf32>
    %9 = tpu.matmul %7, %8, %cst_4 {dimension_numbers = #tpu.dot_dimension_numbers<[1], [0], [0], [1], [0, 0, 1, 1], [], []>} : vector<16x192xbf16>, vector<192x64xbf16>, vector<16x64xf32> -> vector<16x64xf32>
    %c0_5 = arith.constant 0 : index
    %c0_6 = arith.constant 0 : index
    %10 = vector.load %arg4[%c0_5, %c0_6] : memref<2x64xf32, #tpu.memory_space<vmem>>, vector<1x64xf32>
    %11 = vector.broadcast %10 : vector<1x64xf32> to vector<16x64xf32>
    %12 = arith.addf %9, %11 : vector<16x64xf32>
    %cst_7 = arith.constant 0.000000e+00 : f32
    %13 = vector.broadcast %cst_7 : f32 to vector<16x64xf32>
    %14 = arith.maximumf %12, %13 : vector<16x64xf32>
    %15 = arith.truncf %14 : vector<16x64xf32> to vector<16x64xbf16>
    %cst_8 = arith.constant 0.000000e+00 : bf16
    %16 = vector.broadcast %cst_8 : bf16 to vector<1x64xbf16>
    %17 = tpu.concatenate %16, %15, %16 in 0 : vector<1x64xbf16>, vector<16x64xbf16>, vector<1x64xbf16> -> vector<18x64xbf16>
    %18 = vector.extract_strided_slice %17 {offsets = [0, 0], sizes = [16, 64], strides = [1, 1]} : vector<18x64xbf16> to vector<16x64xbf16>
    %19 = vector.extract_strided_slice %17 {offsets = [1, 0], sizes = [16, 64], strides = [1, 1]} : vector<18x64xbf16> to vector<16x64xbf16>
    %20 = vector.extract_strided_slice %17 {offsets = [2, 0], sizes = [16, 64], strides = [1, 1]} : vector<18x64xbf16> to vector<16x64xbf16>
    %21 = tpu.concatenate %18, %19, %20 in 1 : vector<16x64xbf16>, vector<16x64xbf16>, vector<16x64xbf16> -> vector<16x192xbf16>
    %c0_9 = arith.constant 0 : index
    %c0_10 = arith.constant 0 : index
    %22 = vector.load %arg3[%c0_9, %c0_10] : memref<192x64xbf16, #tpu.memory_space<vmem>>, vector<192x64xbf16>
    %cst_11 = arith.constant dense<0.000000e+00> : vector<16x64xf32>
    %23 = tpu.matmul %21, %22, %cst_11 {dimension_numbers = #tpu.dot_dimension_numbers<[1], [0], [0], [1], [0, 0, 1, 1], [], []>} : vector<16x192xbf16>, vector<192x64xbf16>, vector<16x64xf32> -> vector<16x64xf32>
    %c1 = arith.constant 1 : index
    %c0_12 = arith.constant 0 : index
    %24 = vector.load %arg4[%c1, %c0_12] : memref<2x64xf32, #tpu.memory_space<vmem>>, vector<1x64xf32>
    %25 = vector.broadcast %24 : vector<1x64xf32> to vector<16x64xf32>
    %26 = arith.addf %23, %25 : vector<16x64xf32>
    %27 = arith.extf %1 : vector<16x64xbf16> to vector<16x64xf32>
    %28 = arith.addf %26, %27 : vector<16x64xf32>
    %cst_13 = arith.constant 0.000000e+00 : f32
    %29 = vector.broadcast %cst_13 : f32 to vector<16x64xf32>
    %30 = arith.maximumf %28, %29 : vector<16x64xf32>
    %c0_14 = arith.constant 0 : index
    %c0_15 = arith.constant 0 : index
    %c0_16 = arith.constant 0 : index
    %31 = vector.load %arg5[%c0_14, %c0_15, %c0_16] : memref<1x16x64xf32, #tpu.memory_space<vmem>>, vector<1x16x64xf32>
    %32 = vector.shape_cast %31 : vector<1x16x64xf32> to vector<16x64xf32>
    %33 = vector.shape_cast %30 : vector<16x64xf32> to vector<1x16x64xf32>
    tpu.vector_store %arg5[%c0_14, %c0_15, %c0_16], %33 {strides = array<i32>} : memref<1x16x64xf32, #tpu.memory_space<vmem>>, vector<1x16x64xf32>,
    return
  }
  func.func @transform_0(%arg0: i32) -> (i32, i32, i32) {
    %c0_i32 = arith.constant 0 : i32
    %c0_i32_0 = arith.constant 0 : i32
    %c0_i32_1 = arith.constant 0 : i32
    return %arg0, %c0_i32, %c0_i32_0 : i32, i32, i32
  }
  func.func @transform_1(%arg0: i32) -> (i32, i32) {
    %c0_i32 = arith.constant 0 : i32
    %c0_i32_0 = arith.constant 0 : i32
    %c0_i32_1 = arith.constant 0 : i32
    return %c0_i32, %c0_i32_0 : i32, i32
  }
  func.func @transform_2(%arg0: i32) -> (i32, i32) {
    %c0_i32 = arith.constant 0 : i32
    %c0_i32_0 = arith.constant 0 : i32
    %c0_i32_1 = arith.constant 0 : i32
    return %c0_i32, %c0_i32_0 : i32, i32
  }
  func.func @transform_3(%arg0: i32) -> (i32, i32) {
    %c0_i32 = arith.constant 0 : i32
    %c0_i32_0 = arith.constant 0 : i32
    %c0_i32_1 = arith.constant 0 : i32
    return %c0_i32, %c0_i32_0 : i32, i32
  }
  func.func @transform_4(%arg0: i32) -> (i32, i32, i32) {
    %c0_i32 = arith.constant 0 : i32
    %c0_i32_0 = arith.constant 0 : i32
    %c0_i32_1 = arith.constant 0 : i32
    return %arg0, %c0_i32, %c0_i32_0 : i32, i32, i32
  }
}

</mosaic_0001>

<llo_original>
// kernel: tile.13
$region0: #{tile.13}
  #allocation0 [shape = 's32[1]{0}', space=sflag, size = 0x4, scoped, tag = 'scoped memory for tile.13']
  %s0 = inlined_call_operand.vmem [shape: f32[4], index: 0, kind: input, shape index: {}]
  %s1 = inlined_call_operand.vmem [shape: f32[16,4], index: 1, kind: output, shape index: {}]
  // Predicated region
  $region2: #{tile.13} parent=0 // pred_check
    _
  $region3: #{tile.13} parent=0 // pred_check_branch
    %3 = sbr.rel (0) target = $region5
  $region4: #{tile.13} parent=0 // pred_region
    _
  $region5: #{tile.13} parent=0 // pred_fallthru
    _
  %v4 = vld [vmem:[%s0] ss:$0 sm:$0xff]
  %5 = vst [vmem:[%s1] sm:$0xff] %v4
  %s6 = scalar_lea.vmem %s1, 8
  %7 = vst [vmem:[%s6] sm:$0xff] %v4

// kernel: tile.18
$region0: #{tile.18}
  %s0 = inlined_call_operand.vmem [shape: f32[16,4], index: 0, kind: input, shape index: {}]
  %s1 = inlined_call_operand.vmem [shape: f32[1,64], index: 1, kind: output, shape index: {}]
  $region1: #{tile.18} parent=0
    #allocation0 [shape = 'u8[4096]{0}', space=vmem, size = 0x1000, scoped, tag = 'scoped mem for output reshape']
    %v2 = vld [vmem:[%s0] sm:$0x1]
    %vm3 = vcmask 31744
    %4 = vst.msk [vmem:[#allocation0] sm:$0x1] %vm3, %v2
    %s5 = scalar_lea.vmem %s0, 15
    %v6 = vld [vmem:[%s5] sm:$0x1]
    %7 = vrot.lane.b32.xlu0 %v6, 60
    %v8 = vpop.permute.xlu0 %7
    %vm9 = vcmask 523744
    %10 = vst.msk [vmem:[#allocation0] sm:$0x1] %vm9, %v8
    %s11 = scalar_lea.vmem %s0, 14
    %v12 = vld [vmem:[%s11] sm:$0x1]
    %13 = vrot.lane.b32.xlu0 %v12, 56
    %v14 = vpop.permute.xlu0 %13
    %vm15 = vcmask 490944
    %16 = vst.msk [vmem:[#allocation0] sm:$0x1] %vm15, %v14
    %s17 = scalar_lea.vmem %s0, 13
    %v18 = vld [vmem:[%s17] sm:$0x1]
    %19 = vrot.lane.b32.xlu0 %v18, 52
    %v20 = vpop.permute.xlu0 %19
    %vm21 = vcmask 458144
    %22 = vst.msk [vmem:[#allocation0] sm:$0x1] %vm21, %v20
    %s23 = scalar_lea.vmem %s0, 12
    %v24 = vld [vmem:[%s23] sm:$0x1]
    %25 = vrot.lane.b32.xlu0 %v24, 48
    %v26 = vpop.permute.xlu0 %25
    %vm27 = vcmask 425344
    %28 = vst.msk [vmem:[#allocation0] sm:$0x1] %vm27, %v26
    %s29 = scalar_lea.vmem %s0, 11
    %v30 = vld [vmem:[%s29] sm:$0x1]
    %31 = vrot.lane.b32.xlu0 %v30, 44
    %v32 = vpop.permute.xlu0 %31
    %vm33 = vcmask 392544
    %34 = vst.msk [vmem:[#allocation0] sm:$0x1] %vm33, %v32
    %s35 = scalar_lea.vmem %s0, 10
    %v36 = vld [vmem:[%s35] sm:$0x1]
    %37 = vrot.lane.b32.xlu0 %v36, 40
    %v38 = vpop.permute.xlu0 %37
    %vm39 = vcmask 359744
    %40 = vst.msk [vmem:[#allocation0] sm:$0x1] %vm39, %v38
    %s41 = scalar_lea.vmem %s0, 9
    %v42 = vld [vmem:[%s41] sm:$0x1]
    %43 = vrot.lane.b32.xlu0 %v42, 36
    %v44 = vpop.permute.xlu0 %43
    %vm45 = vcmask 326944
    %46 = vst.msk [vmem:[#allocation0] sm:$0x1] %vm45, %v44
    %s47 = scalar_lea.vmem %s0, 8
    %v48 = vld [vmem:[%s47] sm:$0x1]
    %49 = vrot.lane.b32.xlu0 %v48, 32
    %v50 = vpop.permute.xlu0 %49
    %vm51 = vcmask 294144
    %52 = vst.msk [vmem:[#allocation0] sm:$0x1] %vm51, %v50
    %s53 = scalar_lea.vmem %s0, 7
    %v54 = vld [vmem:[%s53] sm:$0x1]
    %55 = vrot.lane.b32.xlu0 %v54, 28
    %v56 = vpop.permute.xlu0 %55
    %vm57 = vcmask 261344
    %58 = vst.msk [vmem:[#allocation0] sm:$0x1] %vm57, %v56
    %s59 = scalar_lea.vmem %s0, 6
    %v60 = vld [vmem:[%s59] sm:$0x1]
    %61 = vrot.lane.b32.xlu0 %v60, 24
    %v62 = vpop.permute.xlu0 %61
    %vm63 = vcmask 228544
    %64 = vst.msk [vmem:[#allocation0] sm:$0x1] %vm63, %v62
    %s65 = scalar_lea.vmem %s0, 5
    %v66 = vld [vmem:[%s65] sm:$0x1]
    %67 = vrot.lane.b32.xlu0 %v66, 20
    %v68 = vpop.permute.xlu0 %67
    %vm69 = vcmask 195744
    %70 = vst.msk [vmem:[#allocation0] sm:$0x1] %vm69, %v68
    %s71 = scalar_lea.vmem %s0, 4
    %v72 = vld [vmem:[%s71] sm:$0x1]
    %73 = vrot.lane.b32.xlu0 %v72, 16
    %v74 = vpop.permute.xlu0 %73
    %vm75 = vcmask 162944
    %76 = vst.msk [vmem:[#allocation0] sm:$0x1] %vm75, %v74
    %s77 = scalar_lea.vmem %s0, 3
    %v78 = vld [vmem:[%s77] sm:$0x1]
    %79 = vrot.lane.b32.xlu0 %v78, 12
    %v80 = vpop.permute.xlu0 %79
    %vm81 = vcmask 130144
    %82 = vst.msk [vmem:[#allocation0] sm:$0x1] %vm81, %v80
    %s83 = scalar_lea.vmem %s0, 2
    %v84 = vld [vmem:[%s83] sm:$0x1]
    %85 = vrot.lane.b32.xlu0 %v84, 8
    %v86 = vpop.permute.xlu0 %85
    %vm87 = vcmask 97344
    %88 = vst.msk [vmem:[#allocation0] sm:$0x1] %vm87, %v86
    %s89 = scalar_lea.vmem %s0, 1
    %v90 = vld [vmem:[%s89] sm:$0x1]
    %91 = vrot.lane.b32.xlu0 %v90, 4
    %v92 = vpop.permute.xlu0 %91
    %vm93 = vcmask 64544
    %94 = vst.msk [vmem:[#allocation0] sm:$0x1] %vm93, %v92
    %s96 = sshllo.u32 0, 1
    %v98 = vld [vmem:[#allocation0] sm:%s96]
    %s99 = sshllo.u32 0, 1
    %100 = vst [vmem:[%s1] sm:%s99] %v98

// kernel: basic_block_forward.1
$region0: #{basic_block_forward.1}
  #allocation0 [shape = 'u32[]', space=smem, size = 0x4, offset = 0x4, fixed_abs, tag = 'smem constant byte address 0x4 - core index']
  #allocation1 [shape = 'u32[144,128]{1,0:T(1,128)}', space=vmem, size = 0x12000, scoped, tag = 'internal scratch']
  %s0 = inlined_call_operand.vmem [shape: bf16[2,16,64], index: 0, kind: input, shape index: {}]
  %s1 = inlined_call_operand.vmem [shape: bf16[192,64], index: 1, kind: input, shape index: {}]
  %s2 = inlined_call_operand.vmem [shape: bf16[192,64], index: 2, kind: input, shape index: {}]
  %s3 = inlined_call_operand.vmem [shape: f32[2,64], index: 3, kind: input, shape index: {}]
  %s4 = inlined_call_operand.vmem [shape: f32[2,16,64], index: 4, kind: output, shape index: {}]
  %s5 = sld [smem:[#allocation0]]
  $region49: #{basic_block_forward.1} parent=0
    _
  %s7 = ssub.s32 1, %s5
  %s8 = scalar_select 0, %s7, %s5
  loop: start=0, step=1, limit=4
  $region2: #{basic_block_forward.1} parent=0 // loop_pre_header
    _
  $region3: #{basic_block_forward.1} parent=0 // loop_header
    %s10 = sphi 0, %s14
    %p11 = scmp.ge.s32.totalorder %s10, 4
    %s20 = sphi 0, %s22
    %s23 = sphi 0, %s20
    %s24 = sphi 0, %s23
    %s40 = sphi 0, %s24
    %s44 = sphi 0, %s44
    %s46 = sphi 0, %s44
    %s47 = sphi 0, %s46
    %s61 = sphi 0, %s47
    %s65 = sphi 0, %s65
    %s67 = sphi 0, %s65
    %s68 = sphi 0, %s67
    %s82 = sphi 0, %s68
    %s86 = sphi 0, %s86
    %s88 = sphi 0, %s86
    %s89 = sphi 0, %s88
    %s103 = sphi 0, %s89
    %s109 = sphi 0, %s111
    %s112 = sphi 0, %s109
    %s113 = sphi 0, %s112
    %s129 = sphi 0, %s113
  $region4: #{basic_block_forward.1} parent=0 // loop_header_branch
    %13 = sbr.rel (%p11) target = $region8
  $region5: #{basic_block_forward.1} parent=0 // loop_body
    %s15 = ssub.s32 %s10, 1
    %s16 = ssub.s32 %s10, 2
    %s17 = sadd.s32 %s10, 1
    %s18 = ssub.s32 %s10, %s17
    %p19 = scmp.eq.s32.totalorder %s18, 0
    %s21 = sadd.s32 %s20, 1
    %s22 = scalar_select %p19, %s20, %s21
    %p25 = pneg %p19
    %p26 = scmp.eq.s32.totalorder %s10, 1
    %p27 = por %p25, %p26
    %p28 = scmp.ne.s32.totalorder %s20, %s23
    %p29 = scmp.eq.s32.totalorder %s10, 0
    %p30 = por %p28, %p29
    %p31 = scmp.ne.s32.totalorder %s20, %s23
    %p32 = scmp.eq.s32.totalorder %s15, 1
    %p33 = por %p31, %p32
    %p34 = scmp.ne.s32.totalorder %s23, %s24
    %p35 = scmp.eq.s32.totalorder %s15, 0
    %p36 = por %p34, %p35
    %p37 = scmp.ne.s32.totalorder %s23, %s24
    %p38 = scmp.eq.s32.totalorder %s16, 1
    %p39 = por %p37, %p38
    %p41 = scmp.ne.s32.totalorder %s24, %s40
    %p42 = scmp.eq.s32.totalorder %s16, 0
    %p43 = por %p41, %p42
    %s45 = sadd.s32 %s44, 1
    %p48 = scmp.eq.s32.totalorder %s10, 1
    %p49 = scmp.ne.s32.totalorder %s44, %s46
    %p50 = scmp.eq.s32.totalorder %s10, 0
    %p51 = por %p49, %p50
    %p52 = scmp.ne.s32.totalorder %s44, %s46
    %p53 = scmp.eq.s32.totalorder %s15, 1
    %p54 = por %p52, %p53
    %p55 = scmp.ne.s32.totalorder %s46, %s47
    %p56 = scmp.eq.s32.totalorder %s15, 0
    %p57 = por %p55, %p56
    %p58 = scmp.ne.s32.totalorder %s46, %s47
    %p59 = scmp.eq.s32.totalorder %s16, 1
    %p60 = por %p58, %p59
    %p62 = scmp.ne.s32.totalorder %s47, %s61
    %p63 = scmp.eq.s32.totalorder %s16, 0
    %p64 = por %p62, %p63
    %s66 = sadd.s32 %s65, 1
    %p69 = scmp.eq.s32.totalorder %s10, 1
    %p70 = scmp.ne.s32.totalorder %s65, %s67
    %p71 = scmp.eq.s32.totalorder %s10, 0
    %p72 = por %p70, %p71
    %p73 = scmp.ne.s32.totalorder %s65, %s67
    %p74 = scmp.eq.s32.totalorder %s15, 1
    %p75 = por %p73, %p74
    %p76 = scmp.ne.s32.totalorder %s67, %s68
    %p77 = scmp.eq.s32.totalorder %s15, 0
    %p78 = por %p76, %p77
    %p79 = scmp.ne.s32.totalorder %s67, %s68
    %p80 = scmp.eq.s32.totalorder %s16, 1
    %p81 = por %p79, %p80
    %p83 = scmp.ne.s32.totalorder %s68, %s82
    %p84 = scmp.eq.s32.totalorder %s16, 0
    %p85 = por %p83, %p84
    %s87 = sadd.s32 %s86, 1
    %p90 = scmp.eq.s32.totalorder %s10, 1
    %p91 = scmp.ne.s32.totalorder %s86, %s88
    %p92 = scmp.eq.s32.totalorder %s10, 0
    %p93 = por %p91, %p92
    %p94 = scmp.ne.s32.totalorder %s86, %s88
    %p95 = scmp.eq.s32.totalorder %s15, 1
    %p96 = por %p94, %p95
    %p97 = scmp.ne.s32.totalorder %s88, %s89
    %p98 = scmp.eq.s32.totalorder %s15, 0
    %p99 = por %p97, %p98
    %p100 = scmp.ne.s32.totalorder %s88, %s89
    %p101 = scmp.eq.s32.totalorder %s16, 1
    %p102 = por %p100, %p101
    %p104 = scmp.ne.s32.totalorder %s89, %s103
    %p105 = scmp.eq.s32.totalorder %s16, 0
    %p106 = por %p104, %p105
    %s107 = ssub.s32 %s10, %s17
    %p108 = scmp.eq.s32.totalorder %s107, 0
    %s110 = sadd.s32 %s109, 1
    %s111 = scalar_select %p108, %s109, %s110
    %p114 = pneg %p108
    %p115 = scmp.eq.s32.totalorder %s10, 1
    %p116 = por %p114, %p115
    %p117 = scmp.ne.s32.totalorder %s109, %s112
    %p118 = scmp.eq.s32.totalorder %s10, 0
    %p119 = por %p117, %p118
    %p120 = scmp.ne.s32.totalorder %s109, %s112
    %p121 = scmp.eq.s32.totalorder %s15, 1
    %p122 = por %p120, %p121
    %p123 = scmp.ne.s32.totalorder %s112, %s113
    %p124 = scmp.eq.s32.totalorder %s15, 0
    %p125 = por %p123, %p124
    %p126 = scmp.ne.s32.totalorder %s112, %s113
    %p127 = scmp.eq.s32.totalorder %s16, 1
    %p128 = por %p126, %p127
    %p130 = scmp.ne.s32.totalorder %s113, %s129
    %p131 = scmp.eq.s32.totalorder %s16, 0
    %p132 = por %p130, %p131
    %p133 = scmp.le.s32.totalorder 1, %s10
    %p134 = scmp.lt.s32.totalorder %s10, 3
    %p135 = pnand %p133, %p134
    %p136 = pneg %p135
    // Predicated region
    $region9: #{basic_block_forward.1} parent=5 // pred_check
      _
    $region10: #{basic_block_forward.1} parent=5 // pred_check_branch
      %138 = sbr.rel (%p135) target = $region12
    $region11: #{basic_block_forward.1} parent=5 // pred_region
      %s139 = ssub.s32 %s10, 1
      // Predicated region
      $region13: #{basic_block_forward.1} parent=11 // pred_check
        %p140 = pneg %p57
      $region14: #{basic_block_forward.1} parent=11 // pred_check_branch
        %142 = sbr.rel (%p140) target = $region16
      $region15: #{basic_block_forward.1} parent=11 // pred_region
        _
      $region16: #{basic_block_forward.1} parent=11 // pred_fallthru
        _
      // Predicated region
      $region17: #{basic_block_forward.1} parent=11 // pred_check
        %p143 = pneg %p78
      $region18: #{basic_block_forward.1} parent=11 // pred_check_branch
        %145 = sbr.rel (%p143) target = $region20
      $region19: #{basic_block_forward.1} parent=11 // pred_region
        _
      $region20: #{basic_block_forward.1} parent=11 // pred_fallthru
        _
      // Predicated region
      $region21: #{basic_block_forward.1} parent=11 // pred_check
        %p146 = pneg %p99
      $region22: #{basic_block_forward.1} parent=11 // pred_check_branch
        %148 = sbr.rel (%p146) target = $region24
      $region23: #{basic_block_forward.1} parent=11 // pred_region
        _
      $region24: #{basic_block_forward.1} parent=11 // pred_fallthru
        _
    $region12: #{basic_block_forward.1} parent=5 // pred_fallthru
      _
    %p149 = scmp.lt.s32.totalorder %s10, 2
    // Predicated region
    $region25: #{basic_block_forward.1} parent=5 // pred_check
      %p150 = pneg %p149
    $region26: #{basic_block_forward.1} parent=5 // pred_check_branch
      %152 = sbr.rel (%p150) target = $region28
    $region27: #{basic_block_forward.1} parent=5 // pred_region
      // Predicated region
      $region29: #{basic_block_forward.1} parent=27 // pred_check
        %p153 = pneg %p30
      $region30: #{basic_block_forward.1} parent=27 // pred_check_branch
        %155 = sbr.rel (%p153) target = $region32
      $region31: #{basic_block_forward.1} parent=27 // pred_region
        %p156 = scmp.lt.s32.totalorder %s10, 1
        %s157 = scalar_select %p156, %s10, 1
        %s158 = smul.addr %s157, 2
        %s159 = smul.addr %s158, 4
        %s160 = scalar_lea.vmem %s0, %s159
      $region32: #{basic_block_forward.1} parent=27 // pred_fallthru
        _
    $region28: #{basic_block_forward.1} parent=5 // pred_fallthru
      _
    %p161 = scmp.le.s32.totalorder 1, %s10
    %p162 = scmp.lt.s32.totalorder %s10, 3
    %p163 = pnand %p161, %p162
    %p164 = pneg %p163
    // Predicated region
    $region33: #{basic_block_forward.1} parent=5 // pred_check
      _
    $region34: #{basic_block_forward.1} parent=5 // pred_check_branch
      %166 = sbr.rel (%p163) target = $region36
    $region35: #{basic_block_forward.1} parent=5 // pred_region
      %s167 = ssub.s32 %s10, 1
      %p168 = scmp.lt.s32.totalorder %s15, 1
      %s169 = scalar_select %p168, %s15, 1
      %s170 = smul.addr %s169, 2
      %s171 = smul.addr %s170, 4
      %s172 = scalar_lea.vmem %s0, %s171
      %p173 = pneg %p36
      %p174 = pneg %p33
      %p175 = pneg %p57
      %p176 = pneg %p54
      %p177 = pneg %p78
      %p178 = pneg %p75
      %p179 = pneg %p99
      %p180 = pneg %p96
      %p181 = pneg %p125
      %p182 = pneg %p122
      %p183 = scmp.lt.s32.totalorder %s15, 1
      %s184 = scalar_select %p183, %s15, 1
      %s185 = smul.addr %s184, 2
      %s186 = smul.addr %s185, 8
      %s187 = scalar_lea.vmem %s4, %s186
      %p188 = scmp.lt.s32.totalorder %s15, 1
      %s189 = scalar_select %p188, %s15, 1
      %s190 = smul.addr %s189, 2
      %s191 = smul.addr %s190, 4
      %s192 = scalar_lea.vmem %s0, %s191
      %p193 = scmp.lt.s32.totalorder %s15, 1
      %s194 = scalar_select %p193, %s15, 1
      %s195 = smul.addr %s194, 2
      %s196 = smul.addr %s195, 8
      %s197 = scalar_lea.vmem %s4, %s196
      %v199 = vld [vmem:[%s192] sm:$0xf]
      %v200 = vld [vmem:[%s192 + $0x4] sm:$0xf]
      %v203 = vunpack.c.l.b16 %v199
      %v204 = vunpack.c.l.b16 %v200
      %v205 = vpack.c.b16 %v204, %v203
      %v207 = vshrl.u32 %v205, 16
      %v209 = vrot.slane %v207, 7
      %v210 = vshll.u32 %v205, 16
      %v212 = vor.u32 %v209, %v210
      %vm215 = vcmask 1040384
      %vm216 = vsmask.f32 256
      %vm217 = vmand %vm215, %vm216
      %v218 = vsel %vm217, 0, %v212
      %v219 = vsel %vm217, %v209, 0
      %vm220 = vsmask.f32 7424
      %v222 = vshrl.u32 %v218, 16
      %v224 = vshll.u32 %v218, 16
      %v226 = vrot.slane %v224, 1
      %v227 = vor.u32 %v222, %v226
      %v229 = vshll.u32 %v219, 16
      %v231 = vrot.slane %v229, 1
      %v232 = vsel %vm220, %v227, %v231
      %233 = vrot.lane.b32.xlu0 %v232, 64
      %v234 = vpop.permute.xlu0 %233
      %vm237 = vcmask 1046528
      %v238 = vrot.slane %v218, 1
      %v239 = vrot.slane %v219, 1
      %v240 = vsel %vm237, %v238, %v239
      %vm241 = vcmask 523264
      %v243 = vsel %vm241, %v218, %v234
      %v245 = vld [vmem:[%s1] sm:$0xf]
      %v246 = vld [vmem:[%s1 + $0x4] sm:$0xf]
      %v247 = vld [vmem:[%s1 + $0x8] sm:$0xf]
      %v248 = vld [vmem:[%s1 + $0xc] sm:$0xf]
      %v249 = vld [vmem:[%s1 + $0x10] sm:$0xf]
      %v250 = vld [vmem:[%s1 + $0x14] sm:$0xf]
      %v251 = vld [vmem:[%s1 + $0x18] sm:$0xf]
      %v252 = vld [vmem:[%s1 + $0x1c] sm:$0xf]
      %v253 = vld [vmem:[%s1 + $0x20] sm:$0xf]
      %v254 = vld [vmem:[%s1 + $0x24] sm:$0xf]
      %v255 = vld [vmem:[%s1 + $0x28] sm:$0xf]
      %v256 = vld [vmem:[%s1 + $0x2c] sm:$0xf]
      %v257 = vld [vmem:[%s1 + $0x30] sm:$0xf]
      %v258 = vld [vmem:[%s1 + $0x34] sm:$0xf]
      %v259 = vld [vmem:[%s1 + $0x38] sm:$0xf]
      %v260 = vld [vmem:[%s1 + $0x3c] sm:$0xf]
      %v261 = vld [vmem:[%s1 + $0x40] sm:$0xf]
      %v262 = vld [vmem:[%s1 + $0x44] sm:$0xf]
      %v263 = vld [vmem:[%s1 + $0x48] sm:$0xf]
      %v264 = vld [vmem:[%s1 + $0x4c] sm:$0xf]
      %v265 = vld [vmem:[%s1 + $0x50] sm:$0xf]
      %v266 = vld [vmem:[%s1 + $0x54] sm:$0xf]
      %v267 = vld [vmem:[%s1 + $0x58] sm:$0xf]
      %v268 = vld [vmem:[%s1 + $0x5c] sm:$0xf]
      %v269 = vld [vmem:[%s3] sm:$0x1]
      %v270 = vlaneseq
      %v271 = vshrl.u32 %v270, 7
      %v272 = vsub.s32 0, %v271
      %v273 = vrot.slane %v269, %v272
      %v298 = vunpack.c.l.b16 %v245
      %v299 = vunpack.c.l.b16 %v246
      %v300 = vunpack.c.l.b16 %v247
      %v301 = vunpack.c.l.b16 %v248
      %v302 = vunpack.c.l.b16 %v249
      %v303 = vunpack.c.l.b16 %v250
      %v304 = vunpack.c.l.b16 %v251
      %v305 = vunpack.c.l.b16 %v252
      %v306 = vunpack.c.l.b16 %v253
      %v307 = vunpack.c.l.b16 %v254
      %v308 = vunpack.c.l.b16 %v255
      %v309 = vunpack.c.l.b16 %v256
      %v310 = vunpack.c.l.b16 %v257
      %v311 = vunpack.c.l.b16 %v258
      %v312 = vunpack.c.l.b16 %v259
      %v313 = vunpack.c.l.b16 %v260
      %v314 = vunpack.c.l.b16 %v261
      %v315 = vunpack.c.l.b16 %v262
      %v316 = vunpack.c.l.b16 %v263
      %v317 = vunpack.c.l.b16 %v264
      %v318 = vunpack.c.l.b16 %v265
      %v319 = vunpack.c.l.b16 %v266
      %v320 = vunpack.c.l.b16 %v267
      %v321 = vunpack.c.l.b16 %v268
      %v322 = vpack.c.b16 %v299, %v298
      %v323 = vpack.c.b16 %v301, %v300
      %v324 = vpack.c.b16 %v303, %v302
      %v325 = vpack.c.b16 %v305, %v304
      %v326 = vpack.c.b16 %v307, %v306
      %v327 = vpack.c.b16 %v309, %v308
      %v328 = vpack.c.b16 %v311, %v310
      %v329 = vpack.c.b16 %v313, %v312
      %v330 = vpack.c.b16 %v315, %v314
      %v331 = vpack.c.b16 %v317, %v316
      %v332 = vpack.c.b16 %v319, %v318
      %v333 = vpack.c.b16 %v321, %v320
      %v347 = vsel %vm241, %v240, 0
      %349 = vmatprep.subr.bf16.mxu0 0
      %350 = vmatpush1.bf16.msra.mxu0 %v322
      %351 = vmatprep.subr.bf16.mxu0 0
      %352 = vmatpush1.bf16.msra.mxu0 %v323
      %353 = vmatprep.subr.bf16.mxu0 0
      %354 = vmatpush1.bf16.msra.mxu0 %v324
      %355 = vmatprep.subr.bf16.mxu0 0
      %356 = vmatpush1.bf16.msra.mxu0 %v325
      %357 = vmatprep.subr.bf16.mxu0 0
      %358 = vmatpush1.bf16.msra.mxu0 %v326
      %359 = vmatprep.subr.bf16.mxu0 0
      %360 = vmatpush1.bf16.msra.mxu0 %v327
      %361 = vmatprep.subr.bf16.mxu0 0
      %362 = vmatpush1.bf16.msra.mxu0 %v328
      %363 = vmatprep.subr.bf16.mxu0 0
      %364 = vmatpush1.bf16.msra.mxu0 %v329
      %365 = vmatprep.subr.bf16.mxu0 0
      %366 = vmatpush1.bf16.msra.mxu0 %v330
      %367 = vmatprep.subr.bf16.mxu0 0
      %368 = vmatpush1.bf16.msra.mxu0 %v331
      %369 = vmatprep.subr.bf16.mxu0 0
      %370 = vmatpush1.bf16.msra.mxu0 %v332
      %371 = vmatprep.subr.bf16.mxu0 0
      %372 = vmatpush1.bf16.msra.mxu0 %v333
      %373 = vmatprep.subr.bf16.mxu0 0
      %374 = vmatpush1.bf16.msra.mxu0 0
      %375 = vmatprep.subr.bf16.mxu0 0
      %376 = vmatpush1.bf16.msra.mxu0 0
      %377 = vmatprep.subr.bf16.mxu0 0
      %378 = vmatpush1.bf16.msra.mxu0 0
      %379 = vmatprep.subr.bf16.mxu0 0
      %380 = vmatpush1.bf16.msra.mxu0 0
      %381 = vmatprep.mubr.bf16.mxu0 %v347
      %382 = vmatmul.mubr.bf16.gmra.mrb[0].mxu0 %v243
      %v383 = vpop.f32.mrb[0].mxu0
      %v384 = vadd.f32 %v273, %v383
      %v385 = vpop.f32.mrb[0].mxu0
      %v386 = vpop.f32.mrb[0].mxu0
      %v387 = vadd.f32 %v273, %v386
      %v388 = vpop.f32.mrb[0].mxu0
      %389 = vdwg.mxu0
      %v390 = vmax.f32 %v384, 0.0
      %v391 = vmax.f32 %v387, 0.0
      %v392 = vpack.c.bf16 %v391, %v390
      %v394 = vshrl.u32 %v392, 16
      %v396 = vrot.slane %v394, 7
      %v397 = vshll.u32 %v392, 16
      %v399 = vor.u32 %v396, %v397
      %v402 = vsel %vm217, 0, %v399
      %v403 = vsel %vm217, %v396, 0
      %v405 = vshrl.u32 %v402, 16
      %v407 = vshll.u32 %v402, 16
      %v409 = vrot.slane %v407, 1
      %v410 = vor.u32 %v405, %v409
      %v412 = vshll.u32 %v403, 16
      %v414 = vrot.slane %v412, 1
      %v415 = vsel %vm220, %v410, %v414
      %416 = vrot.lane.b32.xlu0 %v415, 64
      %v417 = vpop.permute.xlu0 %416
      %v420 = vrot.slane %v402, 1
      %v421 = vrot.slane %v403, 1
      %v422 = vsel %vm237, %v420, %v421
      %v424 = vsel %vm241, %v402, %v417
      %v426 = vld [vmem:[%s2] sm:$0xf]
      %v427 = vld [vmem:[%s2 + $0x4] sm:$0xf]
      %v428 = vld [vmem:[%s2 + $0x8] sm:$0xf]
      %v429 = vld [vmem:[%s2 + $0xc] sm:$0xf]
      %v430 = vld [vmem:[%s2 + $0x10] sm:$0xf]
      %v431 = vld [vmem:[%s2 + $0x14] sm:$0xf]
      %v432 = vld [vmem:[%s2 + $0x18] sm:$0xf]
      %v433 = vld [vmem:[%s2 + $0x1c] sm:$0xf]
      %v434 = vld [vmem:[%s2 + $0x20] sm:$0xf]
      %v435 = vld [vmem:[%s2 + $0x24] sm:$0xf]
      %v436 = vld [vmem:[%s2 + $0x28] sm:$0xf]
      %v437 = vld [vmem:[%s2 + $0x2c] sm:$0xf]
      %v438 = vld [vmem:[%s2 + $0x30] sm:$0xf]
      %v439 = vld [vmem:[%s2 + $0x34] sm:$0xf]
      %v440 = vld [vmem:[%s2 + $0x38] sm:$0xf]
      %v441 = vld [vmem:[%s2 + $0x3c] sm:$0xf]
      %v442 = vld [vmem:[%s2 + $0x40] sm:$0xf]
      %v443 = vld [vmem:[%s2 + $0x44] sm:$0xf]
      %v444 = vld [vmem:[%s2 + $0x48] sm:$0xf]
      %v445 = vld [vmem:[%s2 + $0x4c] sm:$0xf]
      %v446 = vld [vmem:[%s2 + $0x50] sm:$0xf]
      %v447 = vld [vmem:[%s2 + $0x54] sm:$0xf]
      %v448 = vld [vmem:[%s2 + $0x58] sm:$0xf]
      %v449 = vld [vmem:[%s2 + $0x5c] sm:$0xf]
      %v450 = vld [vmem:[%s3 + $0x1] sm:$0x1]
      %v451 = vlaneseq
      %v452 = vshrl.u32 %v451, 7
      %v453 = vsub.s32 0, %v452
      %v454 = vrot.slane %v450, %v453
      %v479 = vunpack.c.l.b16 %v426
      %v480 = vunpack.c.l.b16 %v427
      %v481 = vunpack.c.l.b16 %v428
      %v482 = vunpack.c.l.b16 %v429
      %v483 = vunpack.c.l.b16 %v430
      %v484 = vunpack.c.l.b16 %v431
      %v485 = vunpack.c.l.b16 %v432
      %v486 = vunpack.c.l.b16 %v433
      %v487 = vunpack.c.l.b16 %v434
      %v488 = vunpack.c.l.b16 %v435
      %v489 = vunpack.c.l.b16 %v436
      %v490 = vunpack.c.l.b16 %v437
      %v491 = vunpack.c.l.b16 %v438
      %v492 = vunpack.c.l.b16 %v439
      %v493 = vunpack.c.l.b16 %v440
      %v494 = vunpack.c.l.b16 %v441
      %v495 = vunpack.c.l.b16 %v442
      %v496 = vunpack.c.l.b16 %v443
      %v497 = vunpack.c.l.b16 %v444
      %v498 = vunpack.c.l.b16 %v445
      %v499 = vunpack.c.l.b16 %v446
      %v500 = vunpack.c.l.b16 %v447
      %v501 = vunpack.c.l.b16 %v448
      %v502 = vunpack.c.l.b16 %v449
      %v503 = vpack.c.b16 %v480, %v479
      %v504 = vpack.c.b16 %v482, %v481
      %v505 = vpack.c.b16 %v484, %v483
      %v506 = vpack.c.b16 %v486, %v485
      %v507 = vpack.c.b16 %v488, %v487
      %v508 = vpack.c.b16 %v490, %v489
      %v509 = vpack.c.b16 %v492, %v491
      %v510 = vpack.c.b16 %v494, %v493
      %v511 = vpack.c.b16 %v496, %v495
      %v512 = vpack.c.b16 %v498, %v497
      %v513 = vpack.c.b16 %v500, %v499
      %v514 = vpack.c.b16 %v502, %v501
      %v528 = vsel %vm241, %v422, 0
      %530 = vmatprep.subr.bf16.mxu0 0
      %531 = vmatpush1.bf16.msra.mxu0 %v503
      %532 = vmatprep.subr.bf16.mxu0 0
      %533 = vmatpush1.bf16.msra.mxu0 %v504
      %534 = vmatprep.subr.bf16.mxu0 0
      %535 = vmatpush1.bf16.msra.mxu0 %v505
      %536 = vmatprep.subr.bf16.mxu0 0
      %537 = vmatpush1.bf16.msra.mxu0 %v506
      %538 = vmatprep.subr.bf16.mxu0 0
      %539 = vmatpush1.bf16.msra.mxu0 %v507
      %540 = vmatprep.subr.bf16.mxu0 0
      %541 = vmatpush1.bf16.msra.mxu0 %v508
      %542 = vmatprep.subr.bf16.mxu0 0
      %543 = vmatpush1.bf16.msra.mxu0 %v509
      %544 = vmatprep.subr.bf16.mxu0 0
      %545 = vmatpush1.bf16.msra.mxu0 %v510
      %546 = vmatprep.subr.bf16.mxu0 0
      %547 = vmatpush1.bf16.msra.mxu0 %v511
      %548 = vmatprep.subr.bf16.mxu0 0
      %549 = vmatpush1.bf16.msra.mxu0 %v512
      %550 = vmatprep.subr.bf16.mxu0 0
      %551 = vmatpush1.bf16.msra.mxu0 %v513
      %552 = vmatprep.subr.bf16.mxu0 0
      %553 = vmatpush1.bf16.msra.mxu0 %v514
      %554 = vmatprep.subr.bf16.mxu0 0
      %555 = vmatpush1.bf16.msra.mxu0 0
      %556 = vmatprep.subr.bf16.mxu0 0
      %557 = vmatpush1.bf16.msra.mxu0 0
      %558 = vmatprep.subr.bf16.mxu0 0
      %559 = vmatpush1.bf16.msra.mxu0 0
      %560 = vmatprep.subr.bf16.mxu0 0
      %561 = vmatpush1.bf16.msra.mxu0 0
      %562 = vmatprep.mubr.bf16.mxu0 %v528
      %563 = vmatmul.mubr.bf16.gmra.mrb[0].mxu0 %v424
      %v564 = vpop.f32.mrb[0].mxu0
      %v565 = vadd.f32 %v454, %v564
      %v566 = vpop.f32.mrb[0].mxu0
      %v567 = vpop.f32.mrb[0].mxu0
      %v568 = vadd.f32 %v454, %v567
      %v569 = vpop.f32.mrb[0].mxu0
      %570 = vdwg.mxu0
      %v571 = vunpack.c.l.bf16 %v199
      %v572 = vunpack.c.l.bf16 %v200
      %v573 = vadd.f32 %v565, %v571
      %v574 = vadd.f32 %v568, %v572
      %v575 = vmax.f32 %v573, 0.0
      %v576 = vmax.f32 %v574, 0.0
      %577 = vst.msk [vmem:[%s197] sm:$0xff] %vm241, %v575
      %578 = vst.msk [vmem:[%s197 + $0x8] sm:$0xff] %vm241, %v576
      %p579 = scmp.lt.s32.totalorder %s15, 1
      %s580 = scalar_select %p579, %s15, 1
      %s581 = smul.addr %s580, 2
      %s582 = smul.addr %s581, 8
      %s583 = scalar_lea.vmem %s4, %s582
      // Predicated region
      $region37: #{basic_block_forward.1} parent=35 // pred_check
        %p584 = pneg %p122
      $region38: #{basic_block_forward.1} parent=35 // pred_check_branch
        %586 = sbr.rel (%p584) target = $region40
      $region39: #{basic_block_forward.1} parent=35 // pred_region
        _
      $region40: #{basic_block_forward.1} parent=35 // pred_fallthru
        _
    $region36: #{basic_block_forward.1} parent=5 // pred_fallthru
      _
    %p587 = scmp.le.s32.totalorder 2, %s10
    // Predicated region
    $region41: #{basic_block_forward.1} parent=5 // pred_check
      %p588 = pneg %p587
    $region42: #{basic_block_forward.1} parent=5 // pred_check_branch
      %590 = sbr.rel (%p588) target = $region44
    $region43: #{basic_block_forward.1} parent=5 // pred_region
      %s591 = ssub.s32 %s10, 2
      // Predicated region
      $region45: #{basic_block_forward.1} parent=43 // pred_check
        %p592 = pneg %p128
      $region46: #{basic_block_forward.1} parent=43 // pred_check_branch
        %594 = sbr.rel (%p592) target = $region48
      $region47: #{basic_block_forward.1} parent=43 // pred_region
        %p595 = scmp.lt.s32.totalorder %s16, 1
        %s596 = scalar_select %p595, %s16, 1
        %s597 = smul.addr %s596, 2
        %s598 = smul.addr %s597, 8
        %s599 = scalar_lea.vmem %s4, %s598
      $region48: #{basic_block_forward.1} parent=43 // pred_fallthru
        _
    $region44: #{basic_block_forward.1} parent=5 // pred_fallthru
      _
  $region6: #{basic_block_forward.1} parent=0 // loop_footer
    %s14 = sadd.s32 1, %s10
  $region7: #{basic_block_forward.1} parent=0 // loop_footer_branch
    %9 = sbr.rel target = $region3
  $region8: #{basic_block_forward.1} parent=0 // loop_exit
    _

</llo_original>
